<compile_context>
chip_gen: v5e
topology: v5e:2x2
jax: 0.10.0
libtpu: 0.0.40
codegen_flags: <defaults>
</compile_context>

<pallas_src>
import functools

import jax
import jax.numpy as jnp
from jax.experimental import pallas as pl
from jax.experimental.pallas import tpu as pltpu


HIDDEN = 32          # Linear out_features of the wrapped model
HIDDEN_PAD = 128     # zero-padded to one full vreg lane width (lane-dense stores)


# ------------------------------ Pallas kernel -------------------------------

def _fused_forward_kernel(patches_ref, wconv_ref, cb_ref, w2_ref, fcb_ref,
                          out_ref, *, n_batch):
    """Fused Conv2d(3x3, pad=1) + bias + ReLU + NCHW-flatten + Linear.

    patches_ref: [Cin*9, N*H*W]        im2col patches, batch folded into lanes
    wconv_ref:   [Cout, Cin*9]         conv weight packed to match patch rows
    cb_ref:      [Cout, 1]             conv bias
    w2_ref:      [H*W, Cout*HIDDEN_PAD]  w2[p, c*128+o] = fc_w[o, c*H*W + p]
    fcb_ref:     [1, HIDDEN_PAD]       FC bias (zero padded)
    out_ref:     [N, HIDDEN_PAD]
    """
    cout = wconv_ref.shape[0]
    hw = patches_ref.shape[1] // n_batch
    hpad = fcb_ref.shape[1]

    # ---- conv: ONE im2col GEMM (K=36), batch in the lane dim ----------------
    act = jnp.dot(wconv_ref[...], patches_ref[...],
                  preferred_element_type=jnp.float32)        # [Cout, N*H*W]
    act = jnp.maximum(act + cb_ref[...], 0.0)                # bias + ReLU (f32)

    fcb = fcb_ref[...]                                       # [1, HIDDEN_PAD]
    rows = []
    for n in range(n_batch):
        # 128-aligned lane slice (hw = 256): no realignment work.
        act_n = act[:, n * hw:(n + 1) * hw]                  # [Cout, H*W]
        # One K=256 GEMM; channel c's contribution lands in lane block c.
        tmp = jnp.dot(act_n, w2_ref[...],
                      preferred_element_type=jnp.float32)    # [Cout, Cout*128]
        # torch NCHW .view flatten + Linear == sum of per-channel diagonal
        # blocks (each a full, aligned 128-lane vreg slice).
        row = fcb
        for c in range(cout):
            row = row + tmp[c:c + 1, c * hpad:(c + 1) * hpad]
        rows.append(row)
    # Single lane-dense store of the whole output block.
    out_ref[...] = jnp.concatenate(rows, axis=0).astype(out_ref.dtype)


# ------------------------------ params / glue -------------------------------

def init_params(key, cin=4, cout=8, k=3, h=16, w=16, hidden=HIDDEN):
    """Torch-layout parameters (used by the pure-JAX reference)."""
    k1, k2, k3, k4 = jax.random.split(key, 4)
    conv_w = jax.random.normal(k1, (cout, cin, k, k), jnp.float32) * 0.1
    conv_b = jax.random.normal(k2, (cout,), jnp.float32) * 0.1
    fc_w = jax.random.normal(k3, (hidden, cout * h * w), jnp.float32) * 0.02
    fc_b = jax.random.normal(k4, (hidden,), jnp.float32) * 0.02
    return dict(conv_w=conv_w, conv_b=conv_b, fc_w=fc_w, fc_b=fc_b)


def pack_params(p, h=16, w=16):
    """One-time repack of torch-layout weights into kernel-friendly layouts."""
    cout, cin, kh, kw = p["conv_w"].shape
    hidden = p["fc_w"].shape[0]
    assert hidden == HIDDEN
    hw = h * w
    # conv_w[co, ci, i, j] -> [co, ci*9 + i*kw + j]  (matches im2col row order)
    conv_wk = p["conv_w"].reshape(cout, cin * kh * kw)
    # fc_w[o, c*HW + p] -> w2[p, c*HIDDEN_PAD + o]   (o zero padded 32 -> 128)
    fc3 = jnp.transpose(p["fc_w"].reshape(hidden, cout, hw), (1, 2, 0))  # [c,p,o]
    fc3 = jnp.pad(fc3, ((0, 0), (0, 0), (0, HIDDEN_PAD - hidden)))
    w2 = jnp.transpose(fc3, (1, 0, 2)).reshape(hw, cout * HIDDEN_PAD)
    fcb = jnp.pad(p["fc_b"], (0, HIDDEN_PAD - hidden)).reshape(1, HIDDEN_PAD)
    return dict(
        conv_wk=conv_wk,                        # [Cout, Cin*9]
        conv_b2=p["conv_b"].reshape(cout, 1),   # [Cout, 1]
        w2=w2,                                  # [H*W, Cout*128]
        fc_b2=fcb,                              # [1, 128]
    )


@jax.jit
def ddp_wrapper_forward(packed, x):
    """Forward of AsyncAccumOptimDDPWrapper == forward of the wrapped model.

    The gradient-accumulation hooks, sync(), all_reduce(), all_gather() are
    backward/optimizer-time distributed plumbing with no effect on forward.
    """
    n, c, h, w = x.shape
    cout, cink2 = packed["conv_wk"].shape
    ksize = int(round((cink2 // c) ** 0.5))
    pad = ksize // 2

    # im2col prep (pad + 9 pre-shifted taps), built so every conv tap is a
    # lane-0-aligned row of the patch matrix; allowed to fuse into the
    # pallas_call input below so it does not round-trip HBM as a separate op.
    xp = jnp.pad(x, ((0, 0), (0, 0), (pad, pad), (pad, pad)))
    taps = [xp[:, :, i:i + h, j:j + w] for i in range(ksize) for j in range(ksize)]
    patches = jnp.stack(taps, axis=2)                         # [N, C, k*k, H, W]
    patches = patches.reshape(n, c * ksize * ksize, h * w)    # [N, Cin*9, H*W]
    patches = jnp.transpose(patches, (1, 0, 2)).reshape(
        c * ksize * ksize, n * h * w)                         # [Cin*9, N*H*W]

    kernel = functools.partial(_fused_forward_kernel, n_batch=n)
    out = pl.pallas_call(
        kernel,
        out_shape=jax.ShapeDtypeStruct((n, HIDDEN_PAD), jnp.float32),
        in_specs=[pl.BlockSpec(memory_space=pltpu.MemorySpace.VMEM)] * 5,
        out_specs=pl.BlockSpec(memory_space=pltpu.MemorySpace.VMEM),
        compiler_params=pltpu.CompilerParams(
            # only the im2col patch operand may be input-fused
            allow_input_fusion=[True, False, False, False, False]),
    )(patches, packed["conv_wk"], packed["conv_b2"],
      packed["w2"], packed["fc_b2"])
    return out[:, :HIDDEN]


# TODO(synk): dist.isend/recv/all_reduce/all_gather gradient hooks and sync()
# are backward-only distributed plumbing with no single-device forward
# equivalent (multi-chip would use pltpu.make_async_remote_copy + semaphores);
# omitted from the forward kernel.


def reference_forward(params, x):
    """Pure-JAX reference for the correctness check (torch-layout params)."""
    conv = jax.lax.conv_general_dilated(
        x, params["conv_w"], window_strides=(1, 1), padding="SAME",
        dimension_numbers=("NCHW", "OIHW", "NCHW"))
    conv = jnp.maximum(conv + params["conv_b"][None, :, None, None], 0.0)
    flat = conv.reshape(x.shape[0], -1)
    return flat @ params["fc_w"].T + params["fc_b"]


if __name__ == "__main__":
    key = jax.random.PRNGKey(0)
    pkey, xkey = jax.random.split(key)
    raw_params = init_params(pkey)
    packed_params = pack_params(raw_params)

    # input consistent with the wrapped conv model: NCHW [2, 4, 16, 16]
    x = jax.random.normal(xkey, (2, 4, 16, 16), jnp.float32)

    out = jax.block_until_ready(ddp_wrapper_forward(packed_params, x))
    ref = jax.block_until_ready(reference_forward(raw_params, x))

    assert out.shape == (2, HIDDEN), out.shape
    err = float(jnp.max(jnp.abs(out - ref)))
    assert err < 1e-4, err
    print("KERNEL_OK")
</pallas_src>

<mosaic_0001>
module attributes {stable_mosaic.version = 11 : i64} {
  func.func @_fused_forward_kernel(%arg0: memref<36x512xf32, #tpu.memory_space<vmem>>, %arg1: memref<8x36xf32, #tpu.memory_space<vmem>>, %arg2: memref<8x1xf32, #tpu.memory_space<vmem>>, %arg3: memref<256x1024xf32, #tpu.memory_space<vmem>>, %arg4: memref<1x128xf32, #tpu.memory_space<vmem>>, %arg5: memref<2x128xf32, #tpu.memory_space<vmem>>) attributes {dimension_semantics = [], scalar_prefetch = 0 : i64, scratch_operands = 0 : i64, tpu.core_type = #tpu.core_type<tc>} {
    %c0 = arith.constant 0 : index
    %c0_0 = arith.constant 0 : index
    %0 = vector.load %arg1[%c0, %c0_0] : memref<8x36xf32, #tpu.memory_space<vmem>>, vector<8x36xf32>
    %c0_1 = arith.constant 0 : index
    %c0_2 = arith.constant 0 : index
    %1 = vector.load %arg0[%c0_1, %c0_2] : memref<36x512xf32, #tpu.memory_space<vmem>>, vector<36x512xf32>
    %cst = arith.constant dense<0.000000e+00> : vector<8x512xf32>
    %2 = tpu.matmul %0, %1, %cst {dimension_numbers = #tpu.dot_dimension_numbers<[1], [0], [0], [1], [0, 0, 1, 1], [], []>} : vector<8x36xf32>, vector<36x512xf32>, vector<8x512xf32> -> vector<8x512xf32>
    %c0_3 = arith.constant 0 : index
    %c0_4 = arith.constant 0 : index
    %3 = vector.load %arg2[%c0_3, %c0_4] : memref<8x1xf32, #tpu.memory_space<vmem>>, vector<8x1xf32>
    %4 = vector.broadcast %3 : vector<8x1xf32> to vector<8x512xf32>
    %5 = arith.addf %2, %4 : vector<8x512xf32>
    %cst_5 = arith.constant 0.000000e+00 : f32
    %6 = vector.broadcast %cst_5 : f32 to vector<8x512xf32>
    %7 = arith.maximumf %5, %6 : vector<8x512xf32>
    %c0_6 = arith.constant 0 : index
    %c0_7 = arith.constant 0 : index
    %8 = vector.load %arg4[%c0_6, %c0_7] : memref<1x128xf32, #tpu.memory_space<vmem>>, vector<1x128xf32>
    %9 = vector.extract_strided_slice %7 {offsets = [0, 0], sizes = [8, 256], strides = [1, 1]} : vector<8x512xf32> to vector<8x256xf32>
    %c0_8 = arith.constant 0 : index
    %c0_9 = arith.constant 0 : index
    %10 = vector.load %arg3[%c0_8, %c0_9] : memref<256x1024xf32, #tpu.memory_space<vmem>>, vector<256x1024xf32>
    %cst_10 = arith.constant dense<0.000000e+00> : vector<8x1024xf32>
    %11 = tpu.matmul %9, %10, %cst_10 {dimension_numbers = #tpu.dot_dimension_numbers<[1], [0], [0], [1], [0, 0, 1, 1], [], []>} : vector<8x256xf32>, vector<256x1024xf32>, vector<8x1024xf32> -> vector<8x1024xf32>
    %12 = vector.extract_strided_slice %11 {offsets = [0, 0], sizes = [1, 128], strides = [1, 1]} : vector<8x1024xf32> to vector<1x128xf32>
    %13 = arith.addf %8, %12 : vector<1x128xf32>
    %14 = vector.extract_strided_slice %11 {offsets = [1, 128], sizes = [1, 128], strides = [1, 1]} : vector<8x1024xf32> to vector<1x128xf32>
    %15 = arith.addf %13, %14 : vector<1x128xf32>
    %16 = vector.extract_strided_slice %11 {offsets = [2, 256], sizes = [1, 128], strides = [1, 1]} : vector<8x1024xf32> to vector<1x128xf32>
    %17 = arith.addf %15, %16 : vector<1x128xf32>
    %18 = vector.extract_strided_slice %11 {offsets = [3, 384], sizes = [1, 128], strides = [1, 1]} : vector<8x1024xf32> to vector<1x128xf32>
    %19 = arith.addf %17, %18 : vector<1x128xf32>
    %20 = vector.extract_strided_slice %11 {offsets = [4, 512], sizes = [1, 128], strides = [1, 1]} : vector<8x1024xf32> to vector<1x128xf32>
    %21 = arith.addf %19, %20 : vector<1x128xf32>
    %22 = vector.extract_strided_slice %11 {offsets = [5, 640], sizes = [1, 128], strides = [1, 1]} : vector<8x1024xf32> to vector<1x128xf32>
    %23 = arith.addf %21, %22 : vector<1x128xf32>
    %24 = vector.extract_strided_slice %11 {offsets = [6, 768], sizes = [1, 128], strides = [1, 1]} : vector<8x1024xf32> to vector<1x128xf32>
    %25 = arith.addf %23, %24 : vector<1x128xf32>
    %26 = vector.extract_strided_slice %11 {offsets = [7, 896], sizes = [1, 128], strides = [1, 1]} : vector<8x1024xf32> to vector<1x128xf32>
    %27 = arith.addf %25, %26 : vector<1x128xf32>
    %28 = vector.extract_strided_slice %7 {offsets = [0, 256], sizes = [8, 256], strides = [1, 1]} : vector<8x512xf32> to vector<8x256xf32>
    %c0_11 = arith.constant 0 : index
    %c0_12 = arith.constant 0 : index
    %29 = vector.load %arg3[%c0_11, %c0_12] : memref<256x1024xf32, #tpu.memory_space<vmem>>, vector<256x1024xf32>
    %cst_13 = arith.constant dense<0.000000e+00> : vector<8x1024xf32>
    %30 = tpu.matmul %28, %29, %cst_13 {dimension_numbers = #tpu.dot_dimension_numbers<[1], [0], [0], [1], [0, 0, 1, 1], [], []>} : vector<8x256xf32>, vector<256x1024xf32>, vector<8x1024xf32> -> vector<8x1024xf32>
    %31 = vector.extract_strided_slice %30 {offsets = [0, 0], sizes = [1, 128], strides = [1, 1]} : vector<8x1024xf32> to vector<1x128xf32>
    %32 = arith.addf %8, %31 : vector<1x128xf32>
    %33 = vector.extract_strided_slice %30 {offsets = [1, 128], sizes = [1, 128], strides = [1, 1]} : vector<8x1024xf32> to vector<1x128xf32>
    %34 = arith.addf %32, %33 : vector<1x128xf32>
    %35 = vector.extract_strided_slice %30 {offsets = [2, 256], sizes = [1, 128], strides = [1, 1]} : vector<8x1024xf32> to vector<1x128xf32>
    %36 = arith.addf %34, %35 : vector<1x128xf32>
    %37 = vector.extract_strided_slice %30 {offsets = [3, 384], sizes = [1, 128], strides = [1, 1]} : vector<8x1024xf32> to vector<1x128xf32>
    %38 = arith.addf %36, %37 : vector<1x128xf32>
    %39 = vector.extract_strided_slice %30 {offsets = [4, 512], sizes = [1, 128], strides = [1, 1]} : vector<8x1024xf32> to vector<1x128xf32>
    %40 = arith.addf %38, %39 : vector<1x128xf32>
    %41 = vector.extract_strided_slice %30 {offsets = [5, 640], sizes = [1, 128], strides = [1, 1]} : vector<8x1024xf32> to vector<1x128xf32>
    %42 = arith.addf %40, %41 : vector<1x128xf32>
    %43 = vector.extract_strided_slice %30 {offsets = [6, 768], sizes = [1, 128], strides = [1, 1]} : vector<8x1024xf32> to vector<1x128xf32>
    %44 = arith.addf %42, %43 : vector<1x128xf32>
    %45 = vector.extract_strided_slice %30 {offsets = [7, 896], sizes = [1, 128], strides = [1, 1]} : vector<8x1024xf32> to vector<1x128xf32>
    %46 = arith.addf %44, %45 : vector<1x128xf32>
    %47 = tpu.concatenate %27, %46 in 0 : vector<1x128xf32>, vector<1x128xf32> -> vector<2x128xf32>
    %c0_14 = arith.constant 0 : index
    %c0_15 = arith.constant 0 : index
    %48 = vector.load %arg5[%c0_14, %c0_15] : memref<2x128xf32, #tpu.memory_space<vmem>>, vector<2x128xf32>
    tpu.vector_store %arg5[%c0_14, %c0_15], %47 {strides = array<i32>} : memref<2x128xf32, #tpu.memory_space<vmem>>, vector<2x128xf32>,
    return
  }
}

</mosaic_0001>

<llo_original>
// kernel: ddp_wrapper_forward.1
$region0: #{ddp_wrapper_forward.1}
  #allocation0 [shape = 'u32[]', space=smem, size = 0x4, offset = 0x4, fixed_abs, tag = 'smem constant byte address 0x4 - core index']
  #allocation1 [shape = 'u32[72,128]{1,0:T(1,128)}', space=vmem, size = 0x9000, scoped, tag = 'internal scratch']
  %s0 = inlined_call_operand.vmem [shape: f32[36,512], index: 0, kind: input, shape index: {}]
  %s1 = inlined_call_operand.vmem [shape: f32[8,36], index: 1, kind: input, shape index: {}]
  %s2 = inlined_call_operand.vmem [shape: f32[8,1], index: 2, kind: input, shape index: {}]
  %s3 = inlined_call_operand.vmem [shape: f32[256,1024], index: 3, kind: input, shape index: {}]
  %s4 = inlined_call_operand.vmem [shape: f32[1,128], index: 4, kind: input, shape index: {}]
  %s5 = inlined_call_operand.hbm [shape: f32[2,128], index: 5, kind: output, shape index: {}]
  %s6 = sld [smem:[#allocation0]]
  $region30: #{ddp_wrapper_forward.1} parent=0
    _
  %s8 = ssub.s32 1, %s6
  %s9 = scalar_select 0, %s8, %s6
  $region1: #{ddp_wrapper_forward.1} parent=0
    #allocation2 [shape = 'u8[1024]{0}', space=vmem, size = 0x400, scoped, tag = 'output window, operand 0, single buffered']
    #allocation3 [shape = 's32[1]{0}', space=sflag, size = 0x4, scoped, tag = 'scoped memory for ddp_wrapper_forward.1']
    %10 = vsyncpa [#allocation3], 0
    // Predicated region
    $region2: #{ddp_wrapper_forward.1} parent=1 // pred_check
      _
    $region3: #{ddp_wrapper_forward.1} parent=1 // pred_check_branch
      %12 = sbr.rel (0) target = $region5
    $region4: #{ddp_wrapper_forward.1} parent=1 // pred_region
      _
    $region5: #{ddp_wrapper_forward.1} parent=1 // pred_fallthru
      _
    // Predicated region
    $region6: #{ddp_wrapper_forward.1} parent=1 // pred_check
      _
    $region7: #{ddp_wrapper_forward.1} parent=1 // pred_check_branch
      %14 = sbr.rel (0) target = $region9
    $region8: #{ddp_wrapper_forward.1} parent=1 // pred_region
      _
    $region9: #{ddp_wrapper_forward.1} parent=1 // pred_fallthru
      _
    // Predicated region
    $region10: #{ddp_wrapper_forward.1} parent=1 // pred_check
      _
    $region11: #{ddp_wrapper_forward.1} parent=1 // pred_check_branch
      %16 = sbr.rel (0) target = $region13
    $region12: #{ddp_wrapper_forward.1} parent=1 // pred_region
      _
    $region13: #{ddp_wrapper_forward.1} parent=1 // pred_fallthru
      _
    // Predicated region
    $region14: #{ddp_wrapper_forward.1} parent=1 // pred_check
      _
    $region15: #{ddp_wrapper_forward.1} parent=1 // pred_check_branch
      %18 = sbr.rel (0) target = $region17
    $region16: #{ddp_wrapper_forward.1} parent=1 // pred_region
      _
    $region17: #{ddp_wrapper_forward.1} parent=1 // pred_fallthru
      _
    // Predicated region
    $region18: #{ddp_wrapper_forward.1} parent=1 // pred_check
      _
    $region19: #{ddp_wrapper_forward.1} parent=1 // pred_check_branch
      %20 = sbr.rel (0) target = $region21
    $region20: #{ddp_wrapper_forward.1} parent=1 // pred_region
      _
    $region21: #{ddp_wrapper_forward.1} parent=1 // pred_fallthru
      _
    %v21 = vld [vmem:[%s1] sm:$0xff]
    %v22 = vld [vmem:[%s0] sm:$0xff]
    %v23 = vld [vmem:[%s0 + $0x8] sm:$0xff]
    %v24 = vld [vmem:[%s0 + $0x10] sm:$0xff]
    %v25 = vld [vmem:[%s0 + $0x18] sm:$0xff]
    %v26 = vld [vmem:[%s0 + $0x20] sm:$0xff]
    %v27 = vld [vmem:[%s0 + $0x28] sm:$0xff]
    %v28 = vld [vmem:[%s0 + $0x30] sm:$0xff]
    %v29 = vld [vmem:[%s0 + $0x38] sm:$0xff]
    %v30 = vld [vmem:[%s0 + $0x40] sm:$0xff]
    %v31 = vld [vmem:[%s0 + $0x48] sm:$0xff]
    %v32 = vld [vmem:[%s0 + $0x50] sm:$0xff]
    %v33 = vld [vmem:[%s0 + $0x58] sm:$0xff]
    %v34 = vld [vmem:[%s0 + $0x60] sm:$0xff]
    %v35 = vld [vmem:[%s0 + $0x68] sm:$0xff]
    %v36 = vld [vmem:[%s0 + $0x70] sm:$0xff]
    %v37 = vld [vmem:[%s0 + $0x78] sm:$0xff]
    %v38 = vld [vmem:[%s0 + $0x80] sm:$0xf]
    %v39 = vld [vmem:[%s0 + $0x88] sm:$0xf]
    %v40 = vld [vmem:[%s0 + $0x90] sm:$0xf]
    %v41 = vld [vmem:[%s0 + $0x98] sm:$0xf]
    %v42 = vld [vmem:[%s2] sm:$0xff]
    %44 = vset.pattern.permute.xlu0 0
    %45 = vperm.xlu0 %44, %v42
    %v46 = vpop.permute.xlu0 %45
    %vm48 = vcmask 293888
    %v50 = vsel %vm48, %v21, 0
    %vm52 = vcmask 1043456
    %v54 = vsel %vm52, %v38, 0
    %v57 = vsel %vm52, %v39, 0
    %v60 = vsel %vm52, %v40, 0
    %v63 = vsel %vm52, %v41, 0
    %65 = vmatpush.msra.mxu0 0.0
    %66 = vmatpush.msra.mxu0 0.0
    %67 = vmatpush.msra.mxu0 0.0
    %68 = vmatpush.msra.mxu0 0.0
    %69 = vmatpush.msra.mxu0 0.0
    %70 = vmatpush.msra.mxu0 0.0
    %71 = vmatpush.msra.mxu0 0.0
    %72 = vmatpush.msra.mxu0 0.0
    %73 = vmatpush.msra.mxu0 0.0
    %74 = vmatpush.msra.mxu0 0.0
    %75 = vmatpush.msra.mxu0 0.0
    %76 = vmatpush.msra.mxu0 %v54
    %77 = vmatpush.msra.mxu0 %v34
    %78 = vmatpush.msra.mxu0 %v30
    %79 = vmatpush.msra.mxu0 %v26
    %80 = vmatpush.msra.mxu0 %v22
    %81 = vmatmul.f32.gmra.mxu0 %v50
    %v82 = vpop.f32.mrf.mxu0
    %v83 = vadd.f32 %v46, %v82
    %84 = vdwg.mxu0
    %85 = vmatpush.msra.mxu0 0.0
    %86 = vmatpush.msra.mxu0 0.0
    %87 = vmatpush.msra.mxu0 0.0
    %88 = vmatpush.msra.mxu0 0.0
    %89 = vmatpush.msra.mxu0 0.0
    %90 = vmatpush.msra.mxu0 0.0
    %91 = vmatpush.msra.mxu0 0.0
    %92 = vmatpush.msra.mxu0 0.0
    %93 = vmatpush.msra.mxu0 0.0
    %94 = vmatpush.msra.mxu0 0.0
    %95 = vmatpush.msra.mxu0 0.0
    %96 = vmatpush.msra.mxu0 %v57
    %97 = vmatpush.msra.mxu0 %v35
    %98 = vmatpush.msra.mxu0 %v31
    %99 = vmatpush.msra.mxu0 %v27
    %100 = vmatpush.msra.mxu0 %v23
    %101 = vmatmul.f32.gmra.mxu0 %v50
    %v102 = vpop.f32.mrf.mxu0
    %v103 = vadd.f32 %v46, %v102
    %104 = vdwg.mxu0
    %105 = vmatpush.msra.mxu0 0.0
    %106 = vmatpush.msra.mxu0 0.0
    %107 = vmatpush.msra.mxu0 0.0
    %108 = vmatpush.msra.mxu0 0.0
    %109 = vmatpush.msra.mxu0 0.0
    %110 = vmatpush.msra.mxu0 0.0
    %111 = vmatpush.msra.mxu0 0.0
    %112 = vmatpush.msra.mxu0 0.0
    %113 = vmatpush.msra.mxu0 0.0
    %114 = vmatpush.msra.mxu0 0.0
    %115 = vmatpush.msra.mxu0 0.0
    %116 = vmatpush.msra.mxu0 %v60
    %117 = vmatpush.msra.mxu0 %v36
    %118 = vmatpush.msra.mxu0 %v32
    %119 = vmatpush.msra.mxu0 %v28
    %120 = vmatpush.msra.mxu0 %v24
    %121 = vmatmul.f32.gmra.mxu0 %v50
    %v122 = vpop.f32.mrf.mxu0
    %v123 = vadd.f32 %v46, %v122
    %124 = vdwg.mxu0
    %125 = vmatpush.msra.mxu0 0.0
    %126 = vmatpush.msra.mxu0 0.0
    %127 = vmatpush.msra.mxu0 0.0
    %128 = vmatpush.msra.mxu0 0.0
    %129 = vmatpush.msra.mxu0 0.0
    %130 = vmatpush.msra.mxu0 0.0
    %131 = vmatpush.msra.mxu0 0.0
    %132 = vmatpush.msra.mxu0 0.0
    %133 = vmatpush.msra.mxu0 0.0
    %134 = vmatpush.msra.mxu0 0.0
    %135 = vmatpush.msra.mxu0 0.0
    %136 = vmatpush.msra.mxu0 %v63
    %137 = vmatpush.msra.mxu0 %v37
    %138 = vmatpush.msra.mxu0 %v33
    %139 = vmatpush.msra.mxu0 %v29
    %140 = vmatpush.msra.mxu0 %v25
    %141 = vmatmul.f32.gmra.mxu0 %v50
    %v142 = vpop.f32.mrf.mxu0
    %v143 = vadd.f32 %v46, %v142
    %144 = vdwg.mxu0
    %v145 = vmax.f32 %v83, 0.0
    %v146 = vmax.f32 %v103, 0.0
    %v147 = vmax.f32 %v123, 0.0
    %v148 = vmax.f32 %v143, 0.0
    %v149 = vld [vmem:[%s4] sm:$0x1]
    %v150 = vld [vmem:[%s3] sm:$0xff]
    %v151 = vld [vmem:[%s3 + $0x8] sm:$0xff]
    %v152 = vld [vmem:[%s3 + $0x10] sm:$0xff]
    %v153 = vld [vmem:[%s3 + $0x18] sm:$0xff]
    %v154 = vld [vmem:[%s3 + $0x20] sm:$0xff]
    %v155 = vld [vmem:[%s3 + $0x28] sm:$0xff]
    %v156 = vld [vmem:[%s3 + $0x30] sm:$0xff]
    %v157 = vld [vmem:[%s3 + $0x38] sm:$0xff]
    %v158 = vld [vmem:[%s3 + $0x40] sm:$0xff]
    %v159 = vld [vmem:[%s3 + $0x48] sm:$0xff]
    %v160 = vld [vmem:[%s3 + $0x50] sm:$0xff]
    %v161 = vld [vmem:[%s3 + $0x58] sm:$0xff]
    %v162 = vld [vmem:[%s3 + $0x60] sm:$0xff]
    %v163 = vld [vmem:[%s3 + $0x68] sm:$0xff]
    %v164 = vld [vmem:[%s3 + $0x70] sm:$0xff]
    %v165 = vld [vmem:[%s3 + $0x78] sm:$0xff]
    %v166 = vld [vmem:[%s3 + $0x80] sm:$0xff]
    %v167 = vld [vmem:[%s3 + $0x88] sm:$0xff]
    %v168 = vld [vmem:[%s3 + $0x90] sm:$0xff]
    %v169 = vld [vmem:[%s3 + $0x98] sm:$0xff]
    %v170 = vld [vmem:[%s3 + $0xa0] sm:$0xff]
    %v171 = vld [vmem:[%s3 + $0xa8] sm:$0xff]
    %v172 = vld [vmem:[%s3 + $0xb0] sm:$0xff]
    %v173 = vld [vmem:[%s3 + $0xb8] sm:$0xff]
    %v174 = vld [vmem:[%s3 + $0xc0] sm:$0xff]
    %v175 = vld [vmem:[%s3 + $0xc8] sm:$0xff]
    %v176 = vld [vmem:[%s3 + $0xd0] sm:$0xff]
    %v177 = vld [vmem:[%s3 + $0xd8] sm:$0xff]
    %v178 = vld [vmem:[%s3 + $0xe0] sm:$0xff]
    %v179 = vld [vmem:[%s3 + $0xe8] sm:$0xff]
    %v180 = vld [vmem:[%s3 + $0xf0] sm:$0xff]
    %v181 = vld [vmem:[%s3 + $0xf8] sm:$0xff]
    %v182 = vld [vmem:[%s3 + $0x100] sm:$0xff]
    %v183 = vld [vmem:[%s3 + $0x108] sm:$0xff]
    %v184 = vld [vmem:[%s3 + $0x110] sm:$0xff]
    %v185 = vld [vmem:[%s3 + $0x118] sm:$0xff]
    %v186 = vld [vmem:[%s3 + $0x120] sm:$0xff]
    %v187 = vld [vmem:[%s3 + $0x128] sm:$0xff]
    %v188 = vld [vmem:[%s3 + $0x130] sm:$0xff]
    %v189 = vld [vmem:[%s3 + $0x138] sm:$0xff]
    %v190 = vld [vmem:[%s3 + $0x140] sm:$0xff]
    %v191 = vld [vmem:[%s3 + $0x148] sm:$0xff]
    %v192 = vld [vmem:[%s3 + $0x150] sm:$0xff]
    %v193 = vld [vmem:[%s3 + $0x158] sm:$0xff]
    %v194 = vld [vmem:[%s3 + $0x160] sm:$0xff]
    %v195 = vld [vmem:[%s3 + $0x168] sm:$0xff]
    %v196 = vld [vmem:[%s3 + $0x170] sm:$0xff]
    %v197 = vld [vmem:[%s3 + $0x178] sm:$0xff]
    %v198 = vld [vmem:[%s3 + $0x180] sm:$0xff]
    %v199 = vld [vmem:[%s3 + $0x188] sm:$0xff]
    %v200 = vld [vmem:[%s3 + $0x190] sm:$0xff]
    %v201 = vld [vmem:[%s3 + $0x198] sm:$0xff]
    %v202 = vld [vmem:[%s3 + $0x1a0] sm:$0xff]
    %v203 = vld [vmem:[%s3 + $0x1a8] sm:$0xff]
    %v204 = vld [vmem:[%s3 + $0x1b0] sm:$0xff]
    %v205 = vld [vmem:[%s3 + $0x1b8] sm:$0xff]
    %v206 = vld [vmem:[%s3 + $0x1c0] sm:$0xff]
    %v207 = vld [vmem:[%s3 + $0x1c8] sm:$0xff]
    %v208 = vld [vmem:[%s3 + $0x1d0] sm:$0xff]
    %v209 = vld [vmem:[%s3 + $0x1d8] sm:$0xff]
    %v210 = vld [vmem:[%s3 + $0x1e0] sm:$0xff]
    %v211 = vld [vmem:[%s3 + $0x1e8] sm:$0xff]
    %v212 = vld [vmem:[%s3 + $0x1f0] sm:$0xff]
    %v213 = vld [vmem:[%s3 + $0x1f8] sm:$0xff]
    %v214 = vld [vmem:[%s3 + $0x200] sm:$0xff]
    %v215 = vld [vmem:[%s3 + $0x208] sm:$0xff]
    %v216 = vld [vmem:[%s3 + $0x210] sm:$0xff]
    %v217 = vld [vmem:[%s3 + $0x218] sm:$0xff]
    %v218 = vld [vmem:[%s3 + $0x220] sm:$0xff]
    %v219 = vld [vmem:[%s3 + $0x228] sm:$0xff]
    %v220 = vld [vmem:[%s3 + $0x230] sm:$0xff]
    %v221 = vld [vmem:[%s3 + $0x238] sm:$0xff]
    %v222 = vld [vmem:[%s3 + $0x240] sm:$0xff]
    %v223 = vld [vmem:[%s3 + $0x248] sm:$0xff]
    %v224 = vld [vmem:[%s3 + $0x250] sm:$0xff]
    %v225 = vld [vmem:[%s3 + $0x258] sm:$0xff]
    %v226 = vld [vmem:[%s3 + $0x260] sm:$0xff]
    %v227 = vld [vmem:[%s3 + $0x268] sm:$0xff]
    %v228 = vld [vmem:[%s3 + $0x270] sm:$0xff]
    %v229 = vld [vmem:[%s3 + $0x278] sm:$0xff]
    %v230 = vld [vmem:[%s3 + $0x280] sm:$0xff]
    %v231 = vld [vmem:[%s3 + $0x288] sm:$0xff]
    %v232 = vld [vmem:[%s3 + $0x290] sm:$0xff]
    %v233 = vld [vmem:[%s3 + $0x298] sm:$0xff]
    %v234 = vld [vmem:[%s3 + $0x2a0] sm:$0xff]
    %v235 = vld [vmem:[%s3 + $0x2a8] sm:$0xff]
    %v236 = vld [vmem:[%s3 + $0x2b0] sm:$0xff]
    %v237 = vld [vmem:[%s3 + $0x2b8] sm:$0xff]
    %v238 = vld [vmem:[%s3 + $0x2c0] sm:$0xff]
    %v239 = vld [vmem:[%s3 + $0x2c8] sm:$0xff]
    %v240 = vld [vmem:[%s3 + $0x2d0] sm:$0xff]
    %v241 = vld [vmem:[%s3 + $0x2d8] sm:$0xff]
    %v242 = vld [vmem:[%s3 + $0x2e0] sm:$0xff]
    %v243 = vld [vmem:[%s3 + $0x2e8] sm:$0xff]
    %v244 = vld [vmem:[%s3 + $0x2f0] sm:$0xff]
    %v245 = vld [vmem:[%s3 + $0x2f8] sm:$0xff]
    %v246 = vld [vmem:[%s3 + $0x300] sm:$0xff]
    %v247 = vld [vmem:[%s3 + $0x308] sm:$0xff]
    %v248 = vld [vmem:[%s3 + $0x310] sm:$0xff]
    %v249 = vld [vmem:[%s3 + $0x318] sm:$0xff]
    %v250 = vld [vmem:[%s3 + $0x320] sm:$0xff]
    %v251 = vld [vmem:[%s3 + $0x328] sm:$0xff]
    %v252 = vld [vmem:[%s3 + $0x330] sm:$0xff]
    %v253 = vld [vmem:[%s3 + $0x338] sm:$0xff]
    %v254 = vld [vmem:[%s3 + $0x340] sm:$0xff]
    %v255 = vld [vmem:[%s3 + $0x348] sm:$0xff]
    %v256 = vld [vmem:[%s3 + $0x350] sm:$0xff]
    %v257 = vld [vmem:[%s3 + $0x358] sm:$0xff]
    %v258 = vld [vmem:[%s3 + $0x360] sm:$0xff]
    %v259 = vld [vmem:[%s3 + $0x368] sm:$0xff]
    %v260 = vld [vmem:[%s3 + $0x370] sm:$0xff]
    %v261 = vld [vmem:[%s3 + $0x378] sm:$0xff]
    %v262 = vld [vmem:[%s3 + $0x380] sm:$0xff]
    %v263 = vld [vmem:[%s3 + $0x388] sm:$0xff]
    %v264 = vld [vmem:[%s3 + $0x390] sm:$0xff]
    %v265 = vld [vmem:[%s3 + $0x398] sm:$0xff]
    %v266 = vld [vmem:[%s3 + $0x3a0] sm:$0xff]
    %v267 = vld [vmem:[%s3 + $0x3a8] sm:$0xff]
    %v268 = vld [vmem:[%s3 + $0x3b0] sm:$0xff]
    %v269 = vld [vmem:[%s3 + $0x3b8] sm:$0xff]
    %v270 = vld [vmem:[%s3 + $0x3c0] sm:$0xff]
    %v271 = vld [vmem:[%s3 + $0x3c8] sm:$0xff]
    %v272 = vld [vmem:[%s3 + $0x3d0] sm:$0xff]
    %v273 = vld [vmem:[%s3 + $0x3d8] sm:$0xff]
    %v274 = vld [vmem:[%s3 + $0x3e0] sm:$0xff]
    %v275 = vld [vmem:[%s3 + $0x3e8] sm:$0xff]
    %v276 = vld [vmem:[%s3 + $0x3f0] sm:$0xff]
    %v277 = vld [vmem:[%s3 + $0x3f8] sm:$0xff]
    %v278 = vld [vmem:[%s3 + $0x400] sm:$0xff]
    %v279 = vld [vmem:[%s3 + $0x408] sm:$0xff]
    %v280 = vld [vmem:[%s3 + $0x410] sm:$0xff]
    %v281 = vld [vmem:[%s3 + $0x418] sm:$0xff]
    %v282 = vld [vmem:[%s3 + $0x420] sm:$0xff]
    %v283 = vld [vmem:[%s3 + $0x428] sm:$0xff]
    %v284 = vld [vmem:[%s3 + $0x430] sm:$0xff]
    %v285 = vld [vmem:[%s3 + $0x438] sm:$0xff]
    %v286 = vld [vmem:[%s3 + $0x440] sm:$0xff]
    %v287 = vld [vmem:[%s3 + $0x448] sm:$0xff]
    %v288 = vld [vmem:[%s3 + $0x450] sm:$0xff]
    %v289 = vld [vmem:[%s3 + $0x458] sm:$0xff]
    %v290 = vld [vmem:[%s3 + $0x460] sm:$0xff]
    %v291 = vld [vmem:[%s3 + $0x468] sm:$0xff]
    %v292 = vld [vmem:[%s3 + $0x470] sm:$0xff]
    %v293 = vld [vmem:[%s3 + $0x478] sm:$0xff]
    %v294 = vld [vmem:[%s3 + $0x480] sm:$0xff]
    %v295 = vld [vmem:[%s3 + $0x488] sm:$0xff]
    %v296 = vld [vmem:[%s3 + $0x490] sm:$0xff]
    %v297 = vld [vmem:[%s3 + $0x498] sm:$0xff]
    %v298 = vld [vmem:[%s3 + $0x4a0] sm:$0xff]
    %v299 = vld [vmem:[%s3 + $0x4a8] sm:$0xff]
    %v300 = vld [vmem:[%s3 + $0x4b0] sm:$0xff]
    %v301 = vld [vmem:[%s3 + $0x4b8] sm:$0xff]
    %v302 = vld [vmem:[%s3 + $0x4c0] sm:$0xff]
    %v303 = vld [vmem:[%s3 + $0x4c8] sm:$0xff]
    %v304 = vld [vmem:[%s3 + $0x4d0] sm:$0xff]
    %v305 = vld [vmem:[%s3 + $0x4d8] sm:$0xff]
    %v306 = vld [vmem:[%s3 + $0x4e0] sm:$0xff]
    %v307 = vld [vmem:[%s3 + $0x4e8] sm:$0xff]
    %v308 = vld [vmem:[%s3 + $0x4f0] sm:$0xff]
    %v309 = vld [vmem:[%s3 + $0x4f8] sm:$0xff]
    %v310 = vld [vmem:[%s3 + $0x500] sm:$0xff]
    %v311 = vld [vmem:[%s3 + $0x508] sm:$0xff]
    %v312 = vld [vmem:[%s3 + $0x510] sm:$0xff]
    %v313 = vld [vmem:[%s3 + $0x518] sm:$0xff]
    %v314 = vld [vmem:[%s3 + $0x520] sm:$0xff]
    %v315 = vld [vmem:[%s3 + $0x528] sm:$0xff]
    %v316 = vld [vmem:[%s3 + $0x530] sm:$0xff]
    %v317 = vld [vmem:[%s3 + $0x538] sm:$0xff]
    %v318 = vld [vmem:[%s3 + $0x540] sm:$0xff]
    %v319 = vld [vmem:[%s3 + $0x548] sm:$0xff]
    %v320 = vld [vmem:[%s3 + $0x550] sm:$0xff]
    %v321 = vld [vmem:[%s3 + $0x558] sm:$0xff]
    %v322 = vld [vmem:[%s3 + $0x560] sm:$0xff]
    %v323 = vld [vmem:[%s3 + $0x568] sm:$0xff]
    %v324 = vld [vmem:[%s3 + $0x570] sm:$0xff]
    %v325 = vld [vmem:[%s3 + $0x578] sm:$0xff]
    %v326 = vld [vmem:[%s3 + $0x580] sm:$0xff]
    %v327 = vld [vmem:[%s3 + $0x588] sm:$0xff]
    %v328 = vld [vmem:[%s3 + $0x590] sm:$0xff]
    %v329 = vld [vmem:[%s3 + $0x598] sm:$0xff]
    %v330 = vld [vmem:[%s3 + $0x5a0] sm:$0xff]
    %v331 = vld [vmem:[%s3 + $0x5a8] sm:$0xff]
    %v332 = vld [vmem:[%s3 + $0x5b0] sm:$0xff]
    %v333 = vld [vmem:[%s3 + $0x5b8] sm:$0xff]
    %v334 = vld [vmem:[%s3 + $0x5c0] sm:$0xff]
    %v335 = vld [vmem:[%s3 + $0x5c8] sm:$0xff]
    %v336 = vld [vmem:[%s3 + $0x5d0] sm:$0xff]
    %v337 = vld [vmem:[%s3 + $0x5d8] sm:$0xff]
    %v338 = vld [vmem:[%s3 + $0x5e0] sm:$0xff]
    %v339 = vld [vmem:[%s3 + $0x5e8] sm:$0xff]
    %v340 = vld [vmem:[%s3 + $0x5f0] sm:$0xff]
    %v341 = vld [vmem:[%s3 + $0x5f8] sm:$0xff]
    %v342 = vld [vmem:[%s3 + $0x600] sm:$0xff]
    %v343 = vld [vmem:[%s3 + $0x608] sm:$0xff]
    %v344 = vld [vmem:[%s3 + $0x610] sm:$0xff]
    %v345 = vld [vmem:[%s3 + $0x618] sm:$0xff]
    %v346 = vld [vmem:[%s3 + $0x620] sm:$0xff]
    %v347 = vld [vmem:[%s3 + $0x628] sm:$0xff]
    %v348 = vld [vmem:[%s3 + $0x630] sm:$0xff]
    %v349 = vld [vmem:[%s3 + $0x638] sm:$0xff]
    %v350 = vld [vmem:[%s3 + $0x640] sm:$0xff]
    %v351 = vld [vmem:[%s3 + $0x648] sm:$0xff]
    %v352 = vld [vmem:[%s3 + $0x650] sm:$0xff]
    %v353 = vld [vmem:[%s3 + $0x658] sm:$0xff]
    %v354 = vld [vmem:[%s3 + $0x660] sm:$0xff]
    %v355 = vld [vmem:[%s3 + $0x668] sm:$0xff]
    %v356 = vld [vmem:[%s3 + $0x670] sm:$0xff]
    %v357 = vld [vmem:[%s3 + $0x678] sm:$0xff]
    %v358 = vld [vmem:[%s3 + $0x680] sm:$0xff]
    %v359 = vld [vmem:[%s3 + $0x688] sm:$0xff]
    %v360 = vld [vmem:[%s3 + $0x690] sm:$0xff]
    %v361 = vld [vmem:[%s3 + $0x698] sm:$0xff]
    %v362 = vld [vmem:[%s3 + $0x6a0] sm:$0xff]
    %v363 = vld [vmem:[%s3 + $0x6a8] sm:$0xff]
    %v364 = vld [vmem:[%s3 + $0x6b0] sm:$0xff]
    %v365 = vld [vmem:[%s3 + $0x6b8] sm:$0xff]
    %v366 = vld [vmem:[%s3 + $0x6c0] sm:$0xff]
    %v367 = vld [vmem:[%s3 + $0x6c8] sm:$0xff]
    %v368 = vld [vmem:[%s3 + $0x6d0] sm:$0xff]
    %v369 = vld [vmem:[%s3 + $0x6d8] sm:$0xff]
    %v370 = vld [vmem:[%s3 + $0x6e0] sm:$0xff]
    %v371 = vld [vmem:[%s3 + $0x6e8] sm:$0xff]
    %v372 = vld [vmem:[%s3 + $0x6f0] sm:$0xff]
    %v373 = vld [vmem:[%s3 + $0x6f8] sm:$0xff]
    %v374 = vld [vmem:[%s3 + $0x700] sm:$0xff]
    %v375 = vld [vmem:[%s3 + $0x708] sm:$0xff]
    %v376 = vld [vmem:[%s3 + $0x710] sm:$0xff]
    %v377 = vld [vmem:[%s3 + $0x718] sm:$0xff]
    %v378 = vld [vmem:[%s3 + $0x720] sm:$0xff]
    %v379 = vld [vmem:[%s3 + $0x728] sm:$0xff]
    %v380 = vld [vmem:[%s3 + $0x730] sm:$0xff]
    %v381 = vld [vmem:[%s3 + $0x738] sm:$0xff]
    %v382 = vld [vmem:[%s3 + $0x740] sm:$0xff]
    %v383 = vld [vmem:[%s3 + $0x748] sm:$0xff]
    %v384 = vld [vmem:[%s3 + $0x750] sm:$0xff]
    %v385 = vld [vmem:[%s3 + $0x758] sm:$0xff]
    %v386 = vld [vmem:[%s3 + $0x760] sm:$0xff]
    %v387 = vld [vmem:[%s3 + $0x768] sm:$0xff]
    %v388 = vld [vmem:[%s3 + $0x770] sm:$0xff]
    %v389 = vld [vmem:[%s3 + $0x778] sm:$0xff]
    %v390 = vld [vmem:[%s3 + $0x780] sm:$0xff]
    %v391 = vld [vmem:[%s3 + $0x788] sm:$0xff]
    %v392 = vld [vmem:[%s3 + $0x790] sm:$0xff]
    %v393 = vld [vmem:[%s3 + $0x798] sm:$0xff]
    %v394 = vld [vmem:[%s3 + $0x7a0] sm:$0xff]
    %v395 = vld [vmem:[%s3 + $0x7a8] sm:$0xff]
    %v396 = vld [vmem:[%s3 + $0x7b0] sm:$0xff]
    %v397 = vld [vmem:[%s3 + $0x7b8] sm:$0xff]
    %v398 = vld [vmem:[%s3 + $0x7c0] sm:$0xff]
    %v399 = vld [vmem:[%s3 + $0x7c8] sm:$0xff]
    %v400 = vld [vmem:[%s3 + $0x7d0] sm:$0xff]
    %v401 = vld [vmem:[%s3 + $0x7d8] sm:$0xff]
    %v402 = vld [vmem:[%s3 + $0x7e0] sm:$0xff]
    %v403 = vld [vmem:[%s3 + $0x7e8] sm:$0xff]
    %v404 = vld [vmem:[%s3 + $0x7f0] sm:$0xff]
    %v405 = vld [vmem:[%s3 + $0x7f8] sm:$0xff]
    %406 = vmatpush.msra.mxu0 %v270
    %407 = vmatpush.msra.mxu0 %v262
    %408 = vmatpush.msra.mxu0 %v254
    %409 = vmatpush.msra.mxu0 %v246
    %410 = vmatpush.msra.mxu0 %v238
    %411 = vmatpush.msra.mxu0 %v230
    %412 = vmatpush.msra.mxu0 %v222
    %413 = vmatpush.msra.mxu0 %v214
    %414 = vmatpush.msra.mxu0 %v206
    %415 = vmatpush.msra.mxu0 %v198
    %416 = vmatpush.msra.mxu0 %v190
    %417 = vmatpush.msra.mxu0 %v182
    %418 = vmatpush.msra.mxu0 %v174
    %419 = vmatpush.msra.mxu0 %v166
    %420 = vmatpush.msra.mxu0 %v158
    %421 = vmatpush.msra.mxu0 %v150
    %422 = vmatmul.f32.gmra.mxu0 %v145
    %v423 = vpop.f32.mrf.mxu0
    %v424 = vadd.f32 0.0, %v423
    %425 = vdwg.mxu0
    %426 = vmatpush.msra.mxu0 %v398
    %427 = vmatpush.msra.mxu0 %v390
    %428 = vmatpush.msra.mxu0 %v382
    %429 = vmatpush.msra.mxu0 %v374
    %430 = vmatpush.msra.mxu0 %v366
    %431 = vmatpush.msra.mxu0 %v358
    %432 = vmatpush.msra.mxu0 %v350
    %433 = vmatpush.msra.mxu0 %v342
    %434 = vmatpush.msra.mxu0 %v334
    %435 = vmatpush.msra.mxu0 %v326
    %436 = vmatpush.msra.mxu0 %v318
    %437 = vmatpush.msra.mxu0 %v310
    %438 = vmatpush.msra.mxu0 %v302
    %439 = vmatpush.msra.mxu0 %v294
    %440 = vmatpush.msra.mxu0 %v286
    %441 = vmatpush.msra.mxu0 %v278
    %442 = vmatmul.f32.gmra.mxu0 %v146
    %v443 = vpop.f32.mrf.mxu0
    %v444 = vadd.f32 %v424, %v443
    %445 = vdwg.mxu0
    %446 = vmatpush.msra.mxu0 %v271
    %447 = vmatpush.msra.mxu0 %v263
    %448 = vmatpush.msra.mxu0 %v255
    %449 = vmatpush.msra.mxu0 %v247
    %450 = vmatpush.msra.mxu0 %v239
    %451 = vmatpush.msra.mxu0 %v231
    %452 = vmatpush.msra.mxu0 %v223
    %453 = vmatpush.msra.mxu0 %v215
    %454 = vmatpush.msra.mxu0 %v207
    %455 = vmatpush.msra.mxu0 %v199
    %456 = vmatpush.msra.mxu0 %v191
    %457 = vmatpush.msra.mxu0 %v183
    %458 = vmatpush.msra.mxu0 %v175
    %459 = vmatpush.msra.mxu0 %v167
    %460 = vmatpush.msra.mxu0 %v159
    %461 = vmatpush.msra.mxu0 %v151
    %462 = vmatmul.f32.gmra.mxu0 %v145
    %v463 = vpop.f32.mrf.mxu0
    %v464 = vadd.f32 0.0, %v463
    %465 = vdwg.mxu0
    %466 = vmatpush.msra.mxu0 %v399
    %467 = vmatpush.msra.mxu0 %v391
    %468 = vmatpush.msra.mxu0 %v383
    %469 = vmatpush.msra.mxu0 %v375
    %470 = vmatpush.msra.mxu0 %v367
    %471 = vmatpush.msra.mxu0 %v359
    %472 = vmatpush.msra.mxu0 %v351
    %473 = vmatpush.msra.mxu0 %v343
    %474 = vmatpush.msra.mxu0 %v335
    %475 = vmatpush.msra.mxu0 %v327
    %476 = vmatpush.msra.mxu0 %v319
    %477 = vmatpush.msra.mxu0 %v311
    %478 = vmatpush.msra.mxu0 %v303
    %479 = vmatpush.msra.mxu0 %v295
    %480 = vmatpush.msra.mxu0 %v287
    %481 = vmatpush.msra.mxu0 %v279
    %482 = vmatmul.f32.gmra.mxu0 %v146
    %v483 = vpop.f32.mrf.mxu0
    %v484 = vadd.f32 %v464, %v483
    %485 = vdwg.mxu0
    %486 = vmatpush.msra.mxu0 %v272
    %487 = vmatpush.msra.mxu0 %v264
    %488 = vmatpush.msra.mxu0 %v256
    %489 = vmatpush.msra.mxu0 %v248
    %490 = vmatpush.msra.mxu0 %v240
    %491 = vmatpush.msra.mxu0 %v232
    %492 = vmatpush.msra.mxu0 %v224
    %493 = vmatpush.msra.mxu0 %v216
    %494 = vmatpush.msra.mxu0 %v208
    %495 = vmatpush.msra.mxu0 %v200
    %496 = vmatpush.msra.mxu0 %v192
    %497 = vmatpush.msra.mxu0 %v184
    %498 = vmatpush.msra.mxu0 %v176
    %499 = vmatpush.msra.mxu0 %v168
    %500 = vmatpush.msra.mxu0 %v160
    %501 = vmatpush.msra.mxu0 %v152
    %502 = vmatmul.f32.gmra.mxu0 %v145
    %v503 = vpop.f32.mrf.mxu0
    %v504 = vadd.f32 0.0, %v503
    %505 = vdwg.mxu0
    %506 = vmatpush.msra.mxu0 %v400
    %507 = vmatpush.msra.mxu0 %v392
    %508 = vmatpush.msra.mxu0 %v384
    %509 = vmatpush.msra.mxu0 %v376
    %510 = vmatpush.msra.mxu0 %v368
    %511 = vmatpush.msra.mxu0 %v360
    %512 = vmatpush.msra.mxu0 %v352
    %513 = vmatpush.msra.mxu0 %v344
    %514 = vmatpush.msra.mxu0 %v336
    %515 = vmatpush.msra.mxu0 %v328
    %516 = vmatpush.msra.mxu0 %v320
    %517 = vmatpush.msra.mxu0 %v312
    %518 = vmatpush.msra.mxu0 %v304
    %519 = vmatpush.msra.mxu0 %v296
    %520 = vmatpush.msra.mxu0 %v288
    %521 = vmatpush.msra.mxu0 %v280
    %522 = vmatmul.f32.gmra.mxu0 %v146
    %v523 = vpop.f32.mrf.mxu0
    %v524 = vadd.f32 %v504, %v523
    %525 = vdwg.mxu0
    %526 = vmatpush.msra.mxu0 %v273
    %527 = vmatpush.msra.mxu0 %v265
    %528 = vmatpush.msra.mxu0 %v257
    %529 = vmatpush.msra.mxu0 %v249
    %530 = vmatpush.msra.mxu0 %v241
    %531 = vmatpush.msra.mxu0 %v233
    %532 = vmatpush.msra.mxu0 %v225
    %533 = vmatpush.msra.mxu0 %v217
    %534 = vmatpush.msra.mxu0 %v209
    %535 = vmatpush.msra.mxu0 %v201
    %536 = vmatpush.msra.mxu0 %v193
    %537 = vmatpush.msra.mxu0 %v185
    %538 = vmatpush.msra.mxu0 %v177
    %539 = vmatpush.msra.mxu0 %v169
    %540 = vmatpush.msra.mxu0 %v161
    %541 = vmatpush.msra.mxu0 %v153
    %542 = vmatmul.f32.gmra.mxu0 %v145
    %v543 = vpop.f32.mrf.mxu0
    %v544 = vadd.f32 0.0, %v543
    %545 = vdwg.mxu0
    %546 = vmatpush.msra.mxu0 %v401
    %547 = vmatpush.msra.mxu0 %v393
    %548 = vmatpush.msra.mxu0 %v385
    %549 = vmatpush.msra.mxu0 %v377
    %550 = vmatpush.msra.mxu0 %v369
    %551 = vmatpush.msra.mxu0 %v361
    %552 = vmatpush.msra.mxu0 %v353
    %553 = vmatpush.msra.mxu0 %v345
    %554 = vmatpush.msra.mxu0 %v337
    %555 = vmatpush.msra.mxu0 %v329
    %556 = vmatpush.msra.mxu0 %v321
    %557 = vmatpush.msra.mxu0 %v313
    %558 = vmatpush.msra.mxu0 %v305
    %559 = vmatpush.msra.mxu0 %v297
    %560 = vmatpush.msra.mxu0 %v289
    %561 = vmatpush.msra.mxu0 %v281
    %562 = vmatmul.f32.gmra.mxu0 %v146
    %v563 = vpop.f32.mrf.mxu0
    %v564 = vadd.f32 %v544, %v563
    %565 = vdwg.mxu0
    %566 = vmatpush.msra.mxu0 %v274
    %567 = vmatpush.msra.mxu0 %v266
    %568 = vmatpush.msra.mxu0 %v258
    %569 = vmatpush.msra.mxu0 %v250
    %570 = vmatpush.msra.mxu0 %v242
    %571 = vmatpush.msra.mxu0 %v234
    %572 = vmatpush.msra.mxu0 %v226
    %573 = vmatpush.msra.mxu0 %v218
    %574 = vmatpush.msra.mxu0 %v210
    %575 = vmatpush.msra.mxu0 %v202
    %576 = vmatpush.msra.mxu0 %v194
    %577 = vmatpush.msra.mxu0 %v186
    %578 = vmatpush.msra.mxu0 %v178
    %579 = vmatpush.msra.mxu0 %v170
    %580 = vmatpush.msra.mxu0 %v162
    %581 = vmatpush.msra.mxu0 %v154
    %582 = vmatmul.f32.gmra.mxu0 %v145
    %v583 = vpop.f32.mrf.mxu0
    %v584 = vadd.f32 0.0, %v583
    %585 = vdwg.mxu0
    %586 = vmatpush.msra.mxu0 %v402
    %587 = vmatpush.msra.mxu0 %v394
    %588 = vmatpush.msra.mxu0 %v386
    %589 = vmatpush.msra.mxu0 %v378
    %590 = vmatpush.msra.mxu0 %v370
    %591 = vmatpush.msra.mxu0 %v362
    %592 = vmatpush.msra.mxu0 %v354
    %593 = vmatpush.msra.mxu0 %v346
    %594 = vmatpush.msra.mxu0 %v338
    %595 = vmatpush.msra.mxu0 %v330
    %596 = vmatpush.msra.mxu0 %v322
    %597 = vmatpush.msra.mxu0 %v314
    %598 = vmatpush.msra.mxu0 %v306
    %599 = vmatpush.msra.mxu0 %v298
    %600 = vmatpush.msra.mxu0 %v290
    %601 = vmatpush.msra.mxu0 %v282
    %602 = vmatmul.f32.gmra.mxu0 %v146
    %v603 = vpop.f32.mrf.mxu0
    %v604 = vadd.f32 %v584, %v603
    %605 = vdwg.mxu0
    %606 = vmatpush.msra.mxu0 %v275
    %607 = vmatpush.msra.mxu0 %v267
    %608 = vmatpush.msra.mxu0 %v259
    %609 = vmatpush.msra.mxu0 %v251
    %610 = vmatpush.msra.mxu0 %v243
    %611 = vmatpush.msra.mxu0 %v235
    %612 = vmatpush.msra.mxu0 %v227
    %613 = vmatpush.msra.mxu0 %v219
    %614 = vmatpush.msra.mxu0 %v211
    %615 = vmatpush.msra.mxu0 %v203
    %616 = vmatpush.msra.mxu0 %v195
    %617 = vmatpush.msra.mxu0 %v187
    %618 = vmatpush.msra.mxu0 %v179
    %619 = vmatpush.msra.mxu0 %v171
    %620 = vmatpush.msra.mxu0 %v163
    %621 = vmatpush.msra.mxu0 %v155
    %622 = vmatmul.f32.gmra.mxu0 %v145
    %v623 = vpop.f32.mrf.mxu0
    %v624 = vadd.f32 0.0, %v623
    %625 = vdwg.mxu0
    %626 = vmatpush.msra.mxu0 %v403
    %627 = vmatpush.msra.mxu0 %v395
    %628 = vmatpush.msra.mxu0 %v387
    %629 = vmatpush.msra.mxu0 %v379
    %630 = vmatpush.msra.mxu0 %v371
    %631 = vmatpush.msra.mxu0 %v363
    %632 = vmatpush.msra.mxu0 %v355
    %633 = vmatpush.msra.mxu0 %v347
    %634 = vmatpush.msra.mxu0 %v339
    %635 = vmatpush.msra.mxu0 %v331
    %636 = vmatpush.msra.mxu0 %v323
    %637 = vmatpush.msra.mxu0 %v315
    %638 = vmatpush.msra.mxu0 %v307
    %639 = vmatpush.msra.mxu0 %v299
    %640 = vmatpush.msra.mxu0 %v291
    %641 = vmatpush.msra.mxu0 %v283
    %642 = vmatmul.f32.gmra.mxu0 %v146
    %v643 = vpop.f32.mrf.mxu0
    %v644 = vadd.f32 %v624, %v643
    %645 = vdwg.mxu0
    %646 = vmatpush.msra.mxu0 %v276
    %647 = vmatpush.msra.mxu0 %v268
    %648 = vmatpush.msra.mxu0 %v260
    %649 = vmatpush.msra.mxu0 %v252
    %650 = vmatpush.msra.mxu0 %v244
    %651 = vmatpush.msra.mxu0 %v236
    %652 = vmatpush.msra.mxu0 %v228
    %653 = vmatpush.msra.mxu0 %v220
    %654 = vmatpush.msra.mxu0 %v212
    %655 = vmatpush.msra.mxu0 %v204
    %656 = vmatpush.msra.mxu0 %v196
    %657 = vmatpush.msra.mxu0 %v188
    %658 = vmatpush.msra.mxu0 %v180
    %659 = vmatpush.msra.mxu0 %v172
    %660 = vmatpush.msra.mxu0 %v164
    %661 = vmatpush.msra.mxu0 %v156
    %662 = vmatmul.f32.gmra.mxu0 %v145
    %v663 = vpop.f32.mrf.mxu0
    %v664 = vadd.f32 0.0, %v663
    %665 = vdwg.mxu0
    %666 = vmatpush.msra.mxu0 %v404
    %667 = vmatpush.msra.mxu0 %v396
    %668 = vmatpush.msra.mxu0 %v388
    %669 = vmatpush.msra.mxu0 %v380
    %670 = vmatpush.msra.mxu0 %v372
    %671 = vmatpush.msra.mxu0 %v364
    %672 = vmatpush.msra.mxu0 %v356
    %673 = vmatpush.msra.mxu0 %v348
    %674 = vmatpush.msra.mxu0 %v340
    %675 = vmatpush.msra.mxu0 %v332
    %676 = vmatpush.msra.mxu0 %v324
    %677 = vmatpush.msra.mxu0 %v316
    %678 = vmatpush.msra.mxu0 %v308
    %679 = vmatpush.msra.mxu0 %v300
    %680 = vmatpush.msra.mxu0 %v292
    %681 = vmatpush.msra.mxu0 %v284
    %682 = vmatmul.f32.gmra.mxu0 %v146
    %v683 = vpop.f32.mrf.mxu0
    %v684 = vadd.f32 %v664, %v683
    %685 = vdwg.mxu0
    %686 = vmatpush.msra.mxu0 %v277
    %687 = vmatpush.msra.mxu0 %v269
    %688 = vmatpush.msra.mxu0 %v261
    %689 = vmatpush.msra.mxu0 %v253
    %690 = vmatpush.msra.mxu0 %v245
    %691 = vmatpush.msra.mxu0 %v237
    %692 = vmatpush.msra.mxu0 %v229
    %693 = vmatpush.msra.mxu0 %v221
    %694 = vmatpush.msra.mxu0 %v213
    %695 = vmatpush.msra.mxu0 %v205
    %696 = vmatpush.msra.mxu0 %v197
    %697 = vmatpush.msra.mxu0 %v189
    %698 = vmatpush.msra.mxu0 %v181
    %699 = vmatpush.msra.mxu0 %v173
    %700 = vmatpush.msra.mxu0 %v165
    %701 = vmatpush.msra.mxu0 %v157
    %702 = vmatmul.f32.gmra.mxu0 %v145
    %v703 = vpop.f32.mrf.mxu0
    %v704 = vadd.f32 0.0, %v703
    %705 = vdwg.mxu0
    %706 = vmatpush.msra.mxu0 %v405
    %707 = vmatpush.msra.mxu0 %v397
    %708 = vmatpush.msra.mxu0 %v389
    %709 = vmatpush.msra.mxu0 %v381
    %710 = vmatpush.msra.mxu0 %v373
    %711 = vmatpush.msra.mxu0 %v365
    %712 = vmatpush.msra.mxu0 %v357
    %713 = vmatpush.msra.mxu0 %v349
    %714 = vmatpush.msra.mxu0 %v341
    %715 = vmatpush.msra.mxu0 %v333
    %716 = vmatpush.msra.mxu0 %v325
    %717 = vmatpush.msra.mxu0 %v317
    %718 = vmatpush.msra.mxu0 %v309
    %719 = vmatpush.msra.mxu0 %v301
    %720 = vmatpush.msra.mxu0 %v293
    %721 = vmatpush.msra.mxu0 %v285
    %722 = vmatmul.f32.gmra.mxu0 %v146
    %v723 = vpop.f32.mrf.mxu0
    %v724 = vadd.f32 %v704, %v723
    %725 = vdwg.mxu0
    %v726 = vadd.f32 %v149, %v444
    %728 = vst [vmem:[#allocation1] sm:$0xff] %v484
    %s729 = scalar_lea.vmem [#allocation1], 1
    %v730 = vld [vmem:[%s729] ss:$9 sm:$0xff]
    %v732 = vadd.f32 %v726, %v730
    %734 = vst [vmem:[#allocation1] sm:$0xff] %v524
    %s735 = scalar_lea.vmem [#allocation1], 2
    %v736 = vld [vmem:[%s735] ss:$9 sm:$0xff]
    %v738 = vadd.f32 %v732, %v736
    %740 = vst [vmem:[#allocation1] sm:$0xff] %v564
    %s741 = scalar_lea.vmem [#allocation1], 3
    %v742 = vld [vmem:[%s741] ss:$9 sm:$0xff]
    %v744 = vadd.f32 %v738, %v742
    %746 = vst [vmem:[#allocation1] sm:$0xff] %v604
    %s747 = scalar_lea.vmem [#allocation1], 4
    %v748 = vld [vmem:[%s747] ss:$9 sm:$0xff]
    %v750 = vadd.f32 %v744, %v748
    %752 = vst [vmem:[#allocation1] sm:$0xff] %v644
    %s753 = scalar_lea.vmem [#allocation1], 5
    %v754 = vld [vmem:[%s753] ss:$9 sm:$0xff]
    %v756 = vadd.f32 %v750, %v754
    %758 = vst [vmem:[#allocation1] sm:$0xff] %v684
    %s759 = scalar_lea.vmem [#allocation1], 6
    %v760 = vld [vmem:[%s759] ss:$9 sm:$0xff]
    %v762 = vadd.f32 %v756, %v760
    %764 = vst [vmem:[#allocation1] sm:$0xff] %v724
    %s765 = scalar_lea.vmem [#allocation1], 7
    %v766 = vld [vmem:[%s765] ss:$9 sm:$0xff]
    %v768 = vadd.f32 %v762, %v766
    %769 = vmatpush.msra.mxu0 %v270
    %770 = vmatpush.msra.mxu0 %v262
    %771 = vmatpush.msra.mxu0 %v254
    %772 = vmatpush.msra.mxu0 %v246
    %773 = vmatpush.msra.mxu0 %v238
    %774 = vmatpush.msra.mxu0 %v230
    %775 = vmatpush.msra.mxu0 %v222
    %776 = vmatpush.msra.mxu0 %v214
    %777 = vmatpush.msra.mxu0 %v206
    %778 = vmatpush.msra.mxu0 %v198
    %779 = vmatpush.msra.mxu0 %v190
    %780 = vmatpush.msra.mxu0 %v182
    %781 = vmatpush.msra.mxu0 %v174
    %782 = vmatpush.msra.mxu0 %v166
    %783 = vmatpush.msra.mxu0 %v158
    %784 = vmatpush.msra.mxu0 %v150
    %785 = vmatmul.f32.gmra.mxu0 %v147
    %v786 = vpop.f32.mrf.mxu0
    %v787 = vadd.f32 0.0, %v786
    %788 = vdwg.mxu0
    %789 = vmatpush.msra.mxu0 %v398
    %790 = vmatpush.msra.mxu0 %v390
    %791 = vmatpush.msra.mxu0 %v382
    %792 = vmatpush.msra.mxu0 %v374
    %793 = vmatpush.msra.mxu0 %v366
    %794 = vmatpush.msra.mxu0 %v358
    %795 = vmatpush.msra.mxu0 %v350
    %796 = vmatpush.msra.mxu0 %v342
    %797 = vmatpush.msra.mxu0 %v334
    %798 = vmatpush.msra.mxu0 %v326
    %799 = vmatpush.msra.mxu0 %v318
    %800 = vmatpush.msra.mxu0 %v310
    %801 = vmatpush.msra.mxu0 %v302
    %802 = vmatpush.msra.mxu0 %v294
    %803 = vmatpush.msra.mxu0 %v286
    %804 = vmatpush.msra.mxu0 %v278
    %805 = vmatmul.f32.gmra.mxu0 %v148
    %v806 = vpop.f32.mrf.mxu0
    %v807 = vadd.f32 %v787, %v806
    %808 = vdwg.mxu0
    %809 = vmatpush.msra.mxu0 %v271
    %810 = vmatpush.msra.mxu0 %v263
    %811 = vmatpush.msra.mxu0 %v255
    %812 = vmatpush.msra.mxu0 %v247
    %813 = vmatpush.msra.mxu0 %v239
    %814 = vmatpush.msra.mxu0 %v231
    %815 = vmatpush.msra.mxu0 %v223
    %816 = vmatpush.msra.mxu0 %v215
    %817 = vmatpush.msra.mxu0 %v207
    %818 = vmatpush.msra.mxu0 %v199
    %819 = vmatpush.msra.mxu0 %v191
    %820 = vmatpush.msra.mxu0 %v183
    %821 = vmatpush.msra.mxu0 %v175
    %822 = vmatpush.msra.mxu0 %v167
    %823 = vmatpush.msra.mxu0 %v159
    %824 = vmatpush.msra.mxu0 %v151
    %825 = vmatmul.f32.gmra.mxu0 %v147
    %v826 = vpop.f32.mrf.mxu0
    %v827 = vadd.f32 0.0, %v826
    %828 = vdwg.mxu0
    %829 = vmatpush.msra.mxu0 %v399
    %830 = vmatpush.msra.mxu0 %v391
    %831 = vmatpush.msra.mxu0 %v383
    %832 = vmatpush.msra.mxu0 %v375
    %833 = vmatpush.msra.mxu0 %v367
    %834 = vmatpush.msra.mxu0 %v359
    %835 = vmatpush.msra.mxu0 %v351
    %836 = vmatpush.msra.mxu0 %v343
    %837 = vmatpush.msra.mxu0 %v335
    %838 = vmatpush.msra.mxu0 %v327
    %839 = vmatpush.msra.mxu0 %v319
    %840 = vmatpush.msra.mxu0 %v311
    %841 = vmatpush.msra.mxu0 %v303
    %842 = vmatpush.msra.mxu0 %v295
    %843 = vmatpush.msra.mxu0 %v287
    %844 = vmatpush.msra.mxu0 %v279
    %845 = vmatmul.f32.gmra.mxu0 %v148
    %v846 = vpop.f32.mrf.mxu0
    %v847 = vadd.f32 %v827, %v846
    %848 = vdwg.mxu0
    %849 = vmatpush.msra.mxu0 %v272
    %850 = vmatpush.msra.mxu0 %v264
    %851 = vmatpush.msra.mxu0 %v256
    %852 = vmatpush.msra.mxu0 %v248
    %853 = vmatpush.msra.mxu0 %v240
    %854 = vmatpush.msra.mxu0 %v232
    %855 = vmatpush.msra.mxu0 %v224
    %856 = vmatpush.msra.mxu0 %v216
    %857 = vmatpush.msra.mxu0 %v208
    %858 = vmatpush.msra.mxu0 %v200
    %859 = vmatpush.msra.mxu0 %v192
    %860 = vmatpush.msra.mxu0 %v184
    %861 = vmatpush.msra.mxu0 %v176
    %862 = vmatpush.msra.mxu0 %v168
    %863 = vmatpush.msra.mxu0 %v160
    %864 = vmatpush.msra.mxu0 %v152
    %865 = vmatmul.f32.gmra.mxu0 %v147
    %v866 = vpop.f32.mrf.mxu0
    %v867 = vadd.f32 0.0, %v866
    %868 = vdwg.mxu0
    %869 = vmatpush.msra.mxu0 %v400
    %870 = vmatpush.msra.mxu0 %v392
    %871 = vmatpush.msra.mxu0 %v384
    %872 = vmatpush.msra.mxu0 %v376
    %873 = vmatpush.msra.mxu0 %v368
    %874 = vmatpush.msra.mxu0 %v360
    %875 = vmatpush.msra.mxu0 %v352
    %876 = vmatpush.msra.mxu0 %v344
    %877 = vmatpush.msra.mxu0 %v336
    %878 = vmatpush.msra.mxu0 %v328
    %879 = vmatpush.msra.mxu0 %v320
    %880 = vmatpush.msra.mxu0 %v312
    %881 = vmatpush.msra.mxu0 %v304
    %882 = vmatpush.msra.mxu0 %v296
    %883 = vmatpush.msra.mxu0 %v288
    %884 = vmatpush.msra.mxu0 %v280
    %885 = vmatmul.f32.gmra.mxu0 %v148
    %v886 = vpop.f32.mrf.mxu0
    %v887 = vadd.f32 %v867, %v886
    %888 = vdwg.mxu0
    %889 = vmatpush.msra.mxu0 %v273
    %890 = vmatpush.msra.mxu0 %v265
    %891 = vmatpush.msra.mxu0 %v257
    %892 = vmatpush.msra.mxu0 %v249
    %893 = vmatpush.msra.mxu0 %v241
    %894 = vmatpush.msra.mxu0 %v233
    %895 = vmatpush.msra.mxu0 %v225
    %896 = vmatpush.msra.mxu0 %v217
    %897 = vmatpush.msra.mxu0 %v209
    %898 = vmatpush.msra.mxu0 %v201
    %899 = vmatpush.msra.mxu0 %v193
    %900 = vmatpush.msra.mxu0 %v185
    %901 = vmatpush.msra.mxu0 %v177
    %902 = vmatpush.msra.mxu0 %v169
    %903 = vmatpush.msra.mxu0 %v161
    %904 = vmatpush.msra.mxu0 %v153
    %905 = vmatmul.f32.gmra.mxu0 %v147
    %v906 = vpop.f32.mrf.mxu0
    %v907 = vadd.f32 0.0, %v906
    %908 = vdwg.mxu0
    %909 = vmatpush.msra.mxu0 %v401
    %910 = vmatpush.msra.mxu0 %v393
    %911 = vmatpush.msra.mxu0 %v385
    %912 = vmatpush.msra.mxu0 %v377
    %913 = vmatpush.msra.mxu0 %v369
    %914 = vmatpush.msra.mxu0 %v361
    %915 = vmatpush.msra.mxu0 %v353
    %916 = vmatpush.msra.mxu0 %v345
    %917 = vmatpush.msra.mxu0 %v337
    %918 = vmatpush.msra.mxu0 %v329
    %919 = vmatpush.msra.mxu0 %v321
    %920 = vmatpush.msra.mxu0 %v313
    %921 = vmatpush.msra.mxu0 %v305
    %922 = vmatpush.msra.mxu0 %v297
    %923 = vmatpush.msra.mxu0 %v289
    %924 = vmatpush.msra.mxu0 %v281
    %925 = vmatmul.f32.gmra.mxu0 %v148
    %v926 = vpop.f32.mrf.mxu0
    %v927 = vadd.f32 %v907, %v926
    %928 = vdwg.mxu0
    %929 = vmatpush.msra.mxu0 %v274
    %930 = vmatpush.msra.mxu0 %v266
    %931 = vmatpush.msra.mxu0 %v258
    %932 = vmatpush.msra.mxu0 %v250
    %933 = vmatpush.msra.mxu0 %v242
    %934 = vmatpush.msra.mxu0 %v234
    %935 = vmatpush.msra.mxu0 %v226
    %936 = vmatpush.msra.mxu0 %v218
    %937 = vmatpush.msra.mxu0 %v210
    %938 = vmatpush.msra.mxu0 %v202
    %939 = vmatpush.msra.mxu0 %v194
    %940 = vmatpush.msra.mxu0 %v186
    %941 = vmatpush.msra.mxu0 %v178
    %942 = vmatpush.msra.mxu0 %v170
    %943 = vmatpush.msra.mxu0 %v162
    %944 = vmatpush.msra.mxu0 %v154
    %945 = vmatmul.f32.gmra.mxu0 %v147
    %v946 = vpop.f32.mrf.mxu0
    %v947 = vadd.f32 0.0, %v946
    %948 = vdwg.mxu0
    %949 = vmatpush.msra.mxu0 %v402
    %950 = vmatpush.msra.mxu0 %v394
    %951 = vmatpush.msra.mxu0 %v386
    %952 = vmatpush.msra.mxu0 %v378
    %953 = vmatpush.msra.mxu0 %v370
    %954 = vmatpush.msra.mxu0 %v362
    %955 = vmatpush.msra.mxu0 %v354
    %956 = vmatpush.msra.mxu0 %v346
    %957 = vmatpush.msra.mxu0 %v338
    %958 = vmatpush.msra.mxu0 %v330
    %959 = vmatpush.msra.mxu0 %v322
    %960 = vmatpush.msra.mxu0 %v314
    %961 = vmatpush.msra.mxu0 %v306
    %962 = vmatpush.msra.mxu0 %v298
    %963 = vmatpush.msra.mxu0 %v290
    %964 = vmatpush.msra.mxu0 %v282
    %965 = vmatmul.f32.gmra.mxu0 %v148
    %v966 = vpop.f32.mrf.mxu0
    %v967 = vadd.f32 %v947, %v966
    %968 = vdwg.mxu0
    %969 = vmatpush.msra.mxu0 %v275
    %970 = vmatpush.msra.mxu0 %v267
    %971 = vmatpush.msra.mxu0 %v259
    %972 = vmatpush.msra.mxu0 %v251
    %973 = vmatpush.msra.mxu0 %v243
    %974 = vmatpush.msra.mxu0 %v235
    %975 = vmatpush.msra.mxu0 %v227
    %976 = vmatpush.msra.mxu0 %v219
    %977 = vmatpush.msra.mxu0 %v211
    %978 = vmatpush.msra.mxu0 %v203
    %979 = vmatpush.msra.mxu0 %v195
    %980 = vmatpush.msra.mxu0 %v187
    %981 = vmatpush.msra.mxu0 %v179
    %982 = vmatpush.msra.mxu0 %v171
    %983 = vmatpush.msra.mxu0 %v163
    %984 = vmatpush.msra.mxu0 %v155
    %985 = vmatmul.f32.gmra.mxu0 %v147
    %v986 = vpop.f32.mrf.mxu0
    %v987 = vadd.f32 0.0, %v986
    %988 = vdwg.mxu0
    %989 = vmatpush.msra.mxu0 %v403
    %990 = vmatpush.msra.mxu0 %v395
    %991 = vmatpush.msra.mxu0 %v387
    %992 = vmatpush.msra.mxu0 %v379
    %993 = vmatpush.msra.mxu0 %v371
    %994 = vmatpush.msra.mxu0 %v363
    %995 = vmatpush.msra.mxu0 %v355
    %996 = vmatpush.msra.mxu0 %v347
    %997 = vmatpush.msra.mxu0 %v339
    %998 = vmatpush.msra.mxu0 %v331
    %999 = vmatpush.msra.mxu0 %v323
    %1000 = vmatpush.msra.mxu0 %v315
    %1001 = vmatpush.msra.mxu0 %v307
    %1002 = vmatpush.msra.mxu0 %v299
    %1003 = vmatpush.msra.mxu0 %v291
    %1004 = vmatpush.msra.mxu0 %v283
    %1005 = vmatmul.f32.gmra.mxu0 %v148
    %v1006 = vpop.f32.mrf.mxu0
    %v1007 = vadd.f32 %v987, %v1006
    %1008 = vdwg.mxu0
    %1009 = vmatpush.msra.mxu0 %v276
    %1010 = vmatpush.msra.mxu0 %v268
    %1011 = vmatpush.msra.mxu0 %v260
    %1012 = vmatpush.msra.mxu0 %v252
    %1013 = vmatpush.msra.mxu0 %v244
    %1014 = vmatpush.msra.mxu0 %v236
    %1015 = vmatpush.msra.mxu0 %v228
    %1016 = vmatpush.msra.mxu0 %v220
    %1017 = vmatpush.msra.mxu0 %v212
    %1018 = vmatpush.msra.mxu0 %v204
    %1019 = vmatpush.msra.mxu0 %v196
    %1020 = vmatpush.msra.mxu0 %v188
    %1021 = vmatpush.msra.mxu0 %v180
    %1022 = vmatpush.msra.mxu0 %v172
    %1023 = vmatpush.msra.mxu0 %v164
    %1024 = vmatpush.msra.mxu0 %v156
    %1025 = vmatmul.f32.gmra.mxu0 %v147
    %v1026 = vpop.f32.mrf.mxu0
    %v1027 = vadd.f32 0.0, %v1026
    %1028 = vdwg.mxu0
    %1029 = vmatpush.msra.mxu0 %v404
    %1030 = vmatpush.msra.mxu0 %v396
    %1031 = vmatpush.msra.mxu0 %v388
    %1032 = vmatpush.msra.mxu0 %v380
    %1033 = vmatpush.msra.mxu0 %v372
    %1034 = vmatpush.msra.mxu0 %v364
    %1035 = vmatpush.msra.mxu0 %v356
    %1036 = vmatpush.msra.mxu0 %v348
    %1037 = vmatpush.msra.mxu0 %v340
    %1038 = vmatpush.msra.mxu0 %v332
    %1039 = vmatpush.msra.mxu0 %v324
    %1040 = vmatpush.msra.mxu0 %v316
    %1041 = vmatpush.msra.mxu0 %v308
    %1042 = vmatpush.msra.mxu0 %v300
    %1043 = vmatpush.msra.mxu0 %v292
    %1044 = vmatpush.msra.mxu0 %v284
    %1045 = vmatmul.f32.gmra.mxu0 %v148
    %v1046 = vpop.f32.mrf.mxu0
    %v1047 = vadd.f32 %v1027, %v1046
    %1048 = vdwg.mxu0
    %1049 = vmatpush.msra.mxu0 %v277
    %1050 = vmatpush.msra.mxu0 %v269
    %1051 = vmatpush.msra.mxu0 %v261
    %1052 = vmatpush.msra.mxu0 %v253
    %1053 = vmatpush.msra.mxu0 %v245
    %1054 = vmatpush.msra.mxu0 %v237
    %1055 = vmatpush.msra.mxu0 %v229
    %1056 = vmatpush.msra.mxu0 %v221
    %1057 = vmatpush.msra.mxu0 %v213
    %1058 = vmatpush.msra.mxu0 %v205
    %1059 = vmatpush.msra.mxu0 %v197
    %1060 = vmatpush.msra.mxu0 %v189
    %1061 = vmatpush.msra.mxu0 %v181
    %1062 = vmatpush.msra.mxu0 %v173
    %1063 = vmatpush.msra.mxu0 %v165
    %1064 = vmatpush.msra.mxu0 %v157
    %1065 = vmatmul.f32.gmra.mxu0 %v147
    %v1066 = vpop.f32.mrf.mxu0
    %v1067 = vadd.f32 0.0, %v1066
    %1068 = vdwg.mxu0
    %1069 = vmatpush.msra.mxu0 %v405
    %1070 = vmatpush.msra.mxu0 %v397
    %1071 = vmatpush.msra.mxu0 %v389
    %1072 = vmatpush.msra.mxu0 %v381
    %1073 = vmatpush.msra.mxu0 %v373
    %1074 = vmatpush.msra.mxu0 %v365
    %1075 = vmatpush.msra.mxu0 %v357
    %1076 = vmatpush.msra.mxu0 %v349
    %1077 = vmatpush.msra.mxu0 %v341
    %1078 = vmatpush.msra.mxu0 %v333
    %1079 = vmatpush.msra.mxu0 %v325
    %1080 = vmatpush.msra.mxu0 %v317
    %1081 = vmatpush.msra.mxu0 %v309
    %1082 = vmatpush.msra.mxu0 %v301
    %1083 = vmatpush.msra.mxu0 %v293
    %1084 = vmatpush.msra.mxu0 %v285
    %1085 = vmatmul.f32.gmra.mxu0 %v148
    %v1086 = vpop.f32.mrf.mxu0
    %v1087 = vadd.f32 %v1067, %v1086
    %1088 = vdwg.mxu0
    %v1089 = vadd.f32 %v149, %v807
    %1091 = vst [vmem:[#allocation1] sm:$0xff] %v847
    %s1092 = scalar_lea.vmem [#allocation1], 1
    %v1093 = vld [vmem:[%s1092] ss:$9 sm:$0xff]
    %v1095 = vadd.f32 %v1089, %v1093
    %1097 = vst [vmem:[#allocation1] sm:$0xff] %v887
    %s1098 = scalar_lea.vmem [#allocation1], 2
    %v1099 = vld [vmem:[%s1098] ss:$9 sm:$0xff]
    %v1101 = vadd.f32 %v1095, %v1099
    %1103 = vst [vmem:[#allocation1] sm:$0xff] %v927
    %s1104 = scalar_lea.vmem [#allocation1], 3
    %v1105 = vld [vmem:[%s1104] ss:$9 sm:$0xff]
    %v1107 = vadd.f32 %v1101, %v1105
    %1109 = vst [vmem:[#allocation1] sm:$0xff] %v967
    %s1110 = scalar_lea.vmem [#allocation1], 4
    %v1111 = vld [vmem:[%s1110] ss:$9 sm:$0xff]
    %v1113 = vadd.f32 %v1107, %v1111
    %1115 = vst [vmem:[#allocation1] sm:$0xff] %v1007
    %s1116 = scalar_lea.vmem [#allocation1], 5
    %v1117 = vld [vmem:[%s1116] ss:$9 sm:$0xff]
    %v1119 = vadd.f32 %v1113, %v1117
    %1121 = vst [vmem:[#allocation1] sm:$0xff] %v1047
    %s1122 = scalar_lea.vmem [#allocation1], 6
    %v1123 = vld [vmem:[%s1122] ss:$9 sm:$0xff]
    %v1125 = vadd.f32 %v1119, %v1123
    %1127 = vst [vmem:[#allocation1] sm:$0xff] %v1087
    %s1128 = scalar_lea.vmem [#allocation1], 7
    %v1129 = vld [vmem:[%s1128] ss:$9 sm:$0xff]
    %v1131 = vadd.f32 %v1125, %v1129
    %v1133 = vperm.slane %v1131, 0
    %vm1135 = vcmask 1040384
    %v1136 = vsel %vm1135, %v768, %v1133
    %1137 = vst [vmem:[#allocation2] sm:$0x3] %v1136
    // Predicated region
    $region22: #{ddp_wrapper_forward.1} parent=1 // pred_check
      _
    $region23: #{ddp_wrapper_forward.1} parent=1 // pred_check_branch
      %1139 = sbr.rel (0) target = $region25
    $region24: #{ddp_wrapper_forward.1} parent=1 // pred_region
      %1141 = vsyncadd [#allocation3], 0
      %s1143 = sshll.u32 [#allocation2], 4
      %s1144 = int_to_ptr.vmem [resolvable:$true] %s1143
      %s1145 = sshll.u32 %s5, 4
      %s1146 = int_to_ptr.hbm [resolvable:$true] %s1145
      %1148 = dma.vmem_to_hbm [thread:$0]  %s1144, 32, %s1146, [#allocation3]
    $region25: #{ddp_wrapper_forward.1} parent=1 // pred_fallthru
      _
    // Predicated region
    $region26: #{ddp_wrapper_forward.1} parent=1 // pred_check
      _
    $region27: #{ddp_wrapper_forward.1} parent=1 // pred_check_branch
      %1150 = sbr.rel (0) target = $region29
    $region28: #{ddp_wrapper_forward.1} parent=1 // pred_region
      %1152 = dma.done [#allocation3], 32
    $region29: #{ddp_wrapper_forward.1} parent=1 // pred_fallthru
      _
    %1153 = vsyncpa [#allocation3], 1

</llo_original>
